<compile_context>
chip_gen: v6e
topology: v6e:2x2x1
jax: 0.10.0
libtpu: 0.0.40
codegen_flags: <defaults>
</compile_context>

<pallas_src>
import functools

import jax
import jax.numpy as jnp
from jax.experimental import pallas as pl
from jax.experimental.pallas import tpu as pltpu

LAYER_DIMS = ((8, 6), (6, 4), (4, 2), (2, 1))
IN_FEATURES = LAYER_DIMS[0][0]
SUBLANES = 8                      # batch rows per sub-tile on the sublane axis
MAX_SUB_TILES = 16                # max R (sub-tiles per grid step)
NUM_PARAMS = sum(fi * fo + fo for fi, fo in LAYER_DIMS)  # 95 scalars


def mlp_kernel(p_ref, x_ref, o_ref):
    """p_ref: (95,) f32 SMEM; x_ref: (8, R*8, lb) f32; o_ref: (R*8, lb) f32."""
    num_sub = x_ref.shape[1] // SUBLANES  # R, static

    def dense_sigmoid(get_in, fan_in, fan_out, w_off, b_off):
        # Input-major accumulation: only one input tile + fan_out accumulators
        # are live at a time (keeps vreg pressure low at lb=512).
        acc = None
        for k in range(fan_in):
            xk = get_in(k)
            terms = [xk * p_ref[w_off + k * fan_out + j] for j in range(fan_out)]
            acc = terms if acc is None else [a + t for a, t in zip(acc, terms)]
        # sigmoid(x) == 0.5 * tanh(0.5 * x) + 0.5  (single EUP op per tile)
        return [0.5 * jnp.tanh(0.5 * (acc[j] + p_ref[b_off + j])) + 0.5
                for j in range(fan_out)]

    @pl.loop(0, num_sub)
    def _(r):
        row = pl.multiple_of(r * SUBLANES, SUBLANES)
        h = None
        off = 0
        for li, (fan_in, fan_out) in enumerate(LAYER_DIMS):
            w_off = off
            b_off = off + fan_in * fan_out
            if li == 0:
                get_in = lambda k: x_ref[k, pl.ds(row, SUBLANES), :]
            else:
                get_in = lambda k, hh=h: hh[k]
            h = dense_sigmoid(get_in, fan_in, fan_out, w_off, b_off)
            off = b_off + fan_out
        o_ref[pl.ds(row, SUBLANES), :] = h[0]


@functools.partial(jax.jit, static_argnames=("lb", "r"))
def mlp_forward(x, params_flat, *, lb=None, r=None):
    """x: (B, 8) f32; params_flat: (95,) f32 packed w1,b1,...,w4,b4 -> (B, 1).

    lb = lane width of a batch sub-tile (multiple of 128); r = sub-tiles per
    grid step. Each grid step processes r * 8 * lb batch elements.
    """
    B = x.shape[0]
    assert x.shape[1] == IN_FEATURES

    if lb is None:
        lb = 512 if B >= SUBLANES * 512 else 128
    assert lb >= 128 and lb % 128 == 0, "lb must be a positive multiple of 128"
    if r is None:
        r_full = pl.cdiv(B, SUBLANES * lb)
        r = r_full if r_full <= MAX_SUB_TILES else MAX_SUB_TILES
    assert r >= 1

    tile = r * SUBLANES * lb
    G = pl.cdiv(B, tile)
    b_pad = G * tile

    # TODO(synk): fuse this pad+transpose into the kernel (extra HBM pass).
    x_pad = x if b_pad == B else jnp.pad(x, ((0, b_pad - B), (0, 0)))
    # feature-major (8, G*r*8, lb): batch index b = sublane_row * lb + lane.
    x_arr = x_pad.T.reshape(IN_FEATURES, G * r * SUBLANES, lb)

    cost = pl.CostEstimate(
        flops=190 * b_pad,           # ~177 MAC/add + sigmoid scale/shift per elem
        transcendentals=13 * b_pad,  # one tanh per hidden/output unit per elem
        bytes_accessed=36 * b_pad,   # 32 B read + 4 B written per elem
    )

    out_arr = pl.pallas_call(
        mlp_kernel,
        out_shape=jax.ShapeDtypeStruct((G * r * SUBLANES, lb), jnp.float32),
        grid=(G,),
        in_specs=[
            # Packed params: whole (95,) array resident in SMEM.
            pl.BlockSpec(memory_space=pltpu.MemorySpace.SMEM),
            # x block: (feature=8, batch-sublane=r*8, batch-lane=lb)
            pl.BlockSpec((IN_FEATURES, r * SUBLANES, lb), lambda i: (0, i, 0)),
        ],
        out_specs=pl.BlockSpec((r * SUBLANES, lb), lambda i: (i, 0)),
        compiler_params=pltpu.CompilerParams(
            dimension_semantics=("parallel",)),
        cost_estimate=cost,
    )(params_flat, x_arr)

    return out_arr.reshape(b_pad)[:B].reshape(B, 1)


def init_params(key):
    """Deterministic init mimicking nn.Linear (weights stored (in, out))."""
    params = {}
    for i, (fan_in, fan_out) in enumerate(LAYER_DIMS, start=1):
        key, kw, kb = jax.random.split(key, 3)
        bound = 1.0 / jnp.sqrt(fan_in)
        params[f"w{i}"] = jax.random.uniform(
            kw, (fan_in, fan_out), jnp.float32, -bound, bound)
        params[f"b{i}"] = jax.random.uniform(
            kb, (fan_out,), jnp.float32, -bound, bound)
    return params


def flatten_params(params):
    parts = []
    for i in range(1, len(LAYER_DIMS) + 1):
        parts.append(params[f"w{i}"].reshape(-1))
        parts.append(params[f"b{i}"].reshape(-1))
    flat = jnp.concatenate(parts)
    assert flat.shape == (NUM_PARAMS,), flat.shape
    return flat


def reference_forward(x, params):
    h = x
    for i in range(1, len(LAYER_DIMS) + 1):
        h = jax.nn.sigmoid(h @ params[f"w{i}"] + params[f"b{i}"])
    return h


if __name__ == "__main__":
    key = jax.random.PRNGKey(0)
    kx1, kx2, kp = jax.random.split(key, 3)

    params = init_params(kp)
    params_flat = flatten_params(params)

    # 1) Default adaptive tiling: lb=128, r=2, single grid step (exercises the
    #    in-kernel sub-tile loop and 48 rows of padding).
    B1 = 2000
    x1 = jax.random.normal(kx1, (B1, IN_FEATURES), jnp.float32)
    out1 = jax.block_until_ready(mlp_forward(x1, params_flat))
    ref1 = reference_forward(x1, params)
    assert out1.shape == (B1, 1), out1.shape
    err1 = float(jnp.max(jnp.abs(out1 - ref1)))
    assert jnp.allclose(out1, ref1, atol=2e-5, rtol=2e-5), err1

    # 2) Explicit small tile to exercise a multi-step grid (G = 3).
    B2 = 3000
    x2 = jax.random.normal(kx2, (B2, IN_FEATURES), jnp.float32)
    out2 = jax.block_until_ready(mlp_forward(x2, params_flat, lb=128, r=1))
    ref2 = reference_forward(x2, params)
    assert out2.shape == (B2, 1), out2.shape
    err2 = float(jnp.max(jnp.abs(out2 - ref2)))
    assert jnp.allclose(out2, ref2, atol=2e-5, rtol=2e-5), err2

    print("KERNEL_OK")
</pallas_src>

<mosaic_0001>
module attributes {stable_mosaic.version = 11 : i64} {
  func.func @mlp_kernel(%arg0: i32, %arg1: memref<95xf32, #tpu.memory_space<smem>>, %arg2: memref<8x16x128xf32, #tpu.memory_space<vmem>>, %arg3: memref<16x128xf32, #tpu.memory_space<vmem>>) attributes {dimension_semantics = [#tpu.dimension_semantics<parallel>], iteration_bounds = array<i64: 1>, scalar_prefetch = 0 : i64, scratch_operands = 0 : i64, tpu.core_type = #tpu.core_type<tc>, window_params = [{transform_indices = @transform_0, window_bounds = array<i64: 95>}, {transform_indices = @transform_1, window_bounds = array<i64: 8, 16, 128>}, {transform_indices = @transform_2, window_bounds = array<i64: 16, 128>}]} {
    %c0_i32 = arith.constant 0 : i32
    %c2_i32 = arith.constant 2 : i32
    %0 = arith.addi %c0_i32, %c2_i32 : i32
    %c1_i32 = arith.constant 1 : i32
    scf.for %arg4 = %c0_i32 to %0 step %c1_i32  : i32 {
      %c1_i32_1 = arith.constant 1 : i32
      %1 = arith.muli %arg4, %c1_i32_1 : i32
      %c0_i32_2 = arith.constant 0 : i32
      %2 = arith.addi %c0_i32_2, %1 : i32
      %c8_i32 = arith.constant 8 : i32
      %3 = arith.muli %2, %c8_i32 : i32
      %4 = tpu.assume_multiple %3, 8 : i32
      %c0 = arith.constant 0 : index
      %5 = arith.index_cast %4 : i32 to index
      %c0_3 = arith.constant 0 : index
      %6 = vector.load %arg2[%c0, %5, %c0_3] : memref<8x16x128xf32, #tpu.memory_space<vmem>>, vector<1x8x128xf32>
      %7 = vector.shape_cast %6 : vector<1x8x128xf32> to vector<8x128xf32>
      %c0_4 = arith.constant 0 : index
      %8 = memref.load %arg1[%c0_4] : memref<95xf32, #tpu.memory_space<smem>>
      %9 = vector.broadcast %8 : f32 to vector<8x128xf32>
      %10 = arith.mulf %7, %9 : vector<8x128xf32>
      %c1 = arith.constant 1 : index
      %11 = memref.load %arg1[%c1] : memref<95xf32, #tpu.memory_space<smem>>
      %12 = vector.broadcast %11 : f32 to vector<8x128xf32>
      %13 = arith.mulf %7, %12 : vector<8x128xf32>
      %c2 = arith.constant 2 : index
      %14 = memref.load %arg1[%c2] : memref<95xf32, #tpu.memory_space<smem>>
      %15 = vector.broadcast %14 : f32 to vector<8x128xf32>
      %16 = arith.mulf %7, %15 : vector<8x128xf32>
      %c3 = arith.constant 3 : index
      %17 = memref.load %arg1[%c3] : memref<95xf32, #tpu.memory_space<smem>>
      %18 = vector.broadcast %17 : f32 to vector<8x128xf32>
      %19 = arith.mulf %7, %18 : vector<8x128xf32>
      %c4 = arith.constant 4 : index
      %20 = memref.load %arg1[%c4] : memref<95xf32, #tpu.memory_space<smem>>
      %21 = vector.broadcast %20 : f32 to vector<8x128xf32>
      %22 = arith.mulf %7, %21 : vector<8x128xf32>
      %c5 = arith.constant 5 : index
      %23 = memref.load %arg1[%c5] : memref<95xf32, #tpu.memory_space<smem>>
      %24 = vector.broadcast %23 : f32 to vector<8x128xf32>
      %25 = arith.mulf %7, %24 : vector<8x128xf32>
      %c1_5 = arith.constant 1 : index
      %26 = arith.index_cast %4 : i32 to index
      %c0_6 = arith.constant 0 : index
      %27 = vector.load %arg2[%c1_5, %26, %c0_6] : memref<8x16x128xf32, #tpu.memory_space<vmem>>, vector<1x8x128xf32>
      %28 = vector.shape_cast %27 : vector<1x8x128xf32> to vector<8x128xf32>
      %c6 = arith.constant 6 : index
      %29 = memref.load %arg1[%c6] : memref<95xf32, #tpu.memory_space<smem>>
      %30 = vector.broadcast %29 : f32 to vector<8x128xf32>
      %31 = arith.mulf %28, %30 : vector<8x128xf32>
      %c7 = arith.constant 7 : index
      %32 = memref.load %arg1[%c7] : memref<95xf32, #tpu.memory_space<smem>>
      %33 = vector.broadcast %32 : f32 to vector<8x128xf32>
      %34 = arith.mulf %28, %33 : vector<8x128xf32>
      %c8 = arith.constant 8 : index
      %35 = memref.load %arg1[%c8] : memref<95xf32, #tpu.memory_space<smem>>
      %36 = vector.broadcast %35 : f32 to vector<8x128xf32>
      %37 = arith.mulf %28, %36 : vector<8x128xf32>
      %c9 = arith.constant 9 : index
      %38 = memref.load %arg1[%c9] : memref<95xf32, #tpu.memory_space<smem>>
      %39 = vector.broadcast %38 : f32 to vector<8x128xf32>
      %40 = arith.mulf %28, %39 : vector<8x128xf32>
      %c10 = arith.constant 10 : index
      %41 = memref.load %arg1[%c10] : memref<95xf32, #tpu.memory_space<smem>>
      %42 = vector.broadcast %41 : f32 to vector<8x128xf32>
      %43 = arith.mulf %28, %42 : vector<8x128xf32>
      %c11 = arith.constant 11 : index
      %44 = memref.load %arg1[%c11] : memref<95xf32, #tpu.memory_space<smem>>
      %45 = vector.broadcast %44 : f32 to vector<8x128xf32>
      %46 = arith.mulf %28, %45 : vector<8x128xf32>
      %47 = arith.addf %10, %31 : vector<8x128xf32>
      %48 = arith.addf %13, %34 : vector<8x128xf32>
      %49 = arith.addf %16, %37 : vector<8x128xf32>
      %50 = arith.addf %19, %40 : vector<8x128xf32>
      %51 = arith.addf %22, %43 : vector<8x128xf32>
      %52 = arith.addf %25, %46 : vector<8x128xf32>
      %c2_7 = arith.constant 2 : index
      %53 = arith.index_cast %4 : i32 to index
      %c0_8 = arith.constant 0 : index
      %54 = vector.load %arg2[%c2_7, %53, %c0_8] : memref<8x16x128xf32, #tpu.memory_space<vmem>>, vector<1x8x128xf32>
      %55 = vector.shape_cast %54 : vector<1x8x128xf32> to vector<8x128xf32>
      %c12 = arith.constant 12 : index
      %56 = memref.load %arg1[%c12] : memref<95xf32, #tpu.memory_space<smem>>
      %57 = vector.broadcast %56 : f32 to vector<8x128xf32>
      %58 = arith.mulf %55, %57 : vector<8x128xf32>
      %c13 = arith.constant 13 : index
      %59 = memref.load %arg1[%c13] : memref<95xf32, #tpu.memory_space<smem>>
      %60 = vector.broadcast %59 : f32 to vector<8x128xf32>
      %61 = arith.mulf %55, %60 : vector<8x128xf32>
      %c14 = arith.constant 14 : index
      %62 = memref.load %arg1[%c14] : memref<95xf32, #tpu.memory_space<smem>>
      %63 = vector.broadcast %62 : f32 to vector<8x128xf32>
      %64 = arith.mulf %55, %63 : vector<8x128xf32>
      %c15 = arith.constant 15 : index
      %65 = memref.load %arg1[%c15] : memref<95xf32, #tpu.memory_space<smem>>
      %66 = vector.broadcast %65 : f32 to vector<8x128xf32>
      %67 = arith.mulf %55, %66 : vector<8x128xf32>
      %c16 = arith.constant 16 : index
      %68 = memref.load %arg1[%c16] : memref<95xf32, #tpu.memory_space<smem>>
      %69 = vector.broadcast %68 : f32 to vector<8x128xf32>
      %70 = arith.mulf %55, %69 : vector<8x128xf32>
      %c17 = arith.constant 17 : index
      %71 = memref.load %arg1[%c17] : memref<95xf32, #tpu.memory_space<smem>>
      %72 = vector.broadcast %71 : f32 to vector<8x128xf32>
      %73 = arith.mulf %55, %72 : vector<8x128xf32>
      %74 = arith.addf %47, %58 : vector<8x128xf32>
      %75 = arith.addf %48, %61 : vector<8x128xf32>
      %76 = arith.addf %49, %64 : vector<8x128xf32>
      %77 = arith.addf %50, %67 : vector<8x128xf32>
      %78 = arith.addf %51, %70 : vector<8x128xf32>
      %79 = arith.addf %52, %73 : vector<8x128xf32>
      %c3_9 = arith.constant 3 : index
      %80 = arith.index_cast %4 : i32 to index
      %c0_10 = arith.constant 0 : index
      %81 = vector.load %arg2[%c3_9, %80, %c0_10] : memref<8x16x128xf32, #tpu.memory_space<vmem>>, vector<1x8x128xf32>
      %82 = vector.shape_cast %81 : vector<1x8x128xf32> to vector<8x128xf32>
      %c18 = arith.constant 18 : index
      %83 = memref.load %arg1[%c18] : memref<95xf32, #tpu.memory_space<smem>>
      %84 = vector.broadcast %83 : f32 to vector<8x128xf32>
      %85 = arith.mulf %82, %84 : vector<8x128xf32>
      %c19 = arith.constant 19 : index
      %86 = memref.load %arg1[%c19] : memref<95xf32, #tpu.memory_space<smem>>
      %87 = vector.broadcast %86 : f32 to vector<8x128xf32>
      %88 = arith.mulf %82, %87 : vector<8x128xf32>
      %c20 = arith.constant 20 : index
      %89 = memref.load %arg1[%c20] : memref<95xf32, #tpu.memory_space<smem>>
      %90 = vector.broadcast %89 : f32 to vector<8x128xf32>
      %91 = arith.mulf %82, %90 : vector<8x128xf32>
      %c21 = arith.constant 21 : index
      %92 = memref.load %arg1[%c21] : memref<95xf32, #tpu.memory_space<smem>>
      %93 = vector.broadcast %92 : f32 to vector<8x128xf32>
      %94 = arith.mulf %82, %93 : vector<8x128xf32>
      %c22 = arith.constant 22 : index
      %95 = memref.load %arg1[%c22] : memref<95xf32, #tpu.memory_space<smem>>
      %96 = vector.broadcast %95 : f32 to vector<8x128xf32>
      %97 = arith.mulf %82, %96 : vector<8x128xf32>
      %c23 = arith.constant 23 : index
      %98 = memref.load %arg1[%c23] : memref<95xf32, #tpu.memory_space<smem>>
      %99 = vector.broadcast %98 : f32 to vector<8x128xf32>
      %100 = arith.mulf %82, %99 : vector<8x128xf32>
      %101 = arith.addf %74, %85 : vector<8x128xf32>
      %102 = arith.addf %75, %88 : vector<8x128xf32>
      %103 = arith.addf %76, %91 : vector<8x128xf32>
      %104 = arith.addf %77, %94 : vector<8x128xf32>
      %105 = arith.addf %78, %97 : vector<8x128xf32>
      %106 = arith.addf %79, %100 : vector<8x128xf32>
      %c4_11 = arith.constant 4 : index
      %107 = arith.index_cast %4 : i32 to index
      %c0_12 = arith.constant 0 : index
      %108 = vector.load %arg2[%c4_11, %107, %c0_12] : memref<8x16x128xf32, #tpu.memory_space<vmem>>, vector<1x8x128xf32>
      %109 = vector.shape_cast %108 : vector<1x8x128xf32> to vector<8x128xf32>
      %c24 = arith.constant 24 : index
      %110 = memref.load %arg1[%c24] : memref<95xf32, #tpu.memory_space<smem>>
      %111 = vector.broadcast %110 : f32 to vector<8x128xf32>
      %112 = arith.mulf %109, %111 : vector<8x128xf32>
      %c25 = arith.constant 25 : index
      %113 = memref.load %arg1[%c25] : memref<95xf32, #tpu.memory_space<smem>>
      %114 = vector.broadcast %113 : f32 to vector<8x128xf32>
      %115 = arith.mulf %109, %114 : vector<8x128xf32>
      %c26 = arith.constant 26 : index
      %116 = memref.load %arg1[%c26] : memref<95xf32, #tpu.memory_space<smem>>
      %117 = vector.broadcast %116 : f32 to vector<8x128xf32>
      %118 = arith.mulf %109, %117 : vector<8x128xf32>
      %c27 = arith.constant 27 : index
      %119 = memref.load %arg1[%c27] : memref<95xf32, #tpu.memory_space<smem>>
      %120 = vector.broadcast %119 : f32 to vector<8x128xf32>
      %121 = arith.mulf %109, %120 : vector<8x128xf32>
      %c28 = arith.constant 28 : index
      %122 = memref.load %arg1[%c28] : memref<95xf32, #tpu.memory_space<smem>>
      %123 = vector.broadcast %122 : f32 to vector<8x128xf32>
      %124 = arith.mulf %109, %123 : vector<8x128xf32>
      %c29 = arith.constant 29 : index
      %125 = memref.load %arg1[%c29] : memref<95xf32, #tpu.memory_space<smem>>
      %126 = vector.broadcast %125 : f32 to vector<8x128xf32>
      %127 = arith.mulf %109, %126 : vector<8x128xf32>
      %128 = arith.addf %101, %112 : vector<8x128xf32>
      %129 = arith.addf %102, %115 : vector<8x128xf32>
      %130 = arith.addf %103, %118 : vector<8x128xf32>
      %131 = arith.addf %104, %121 : vector<8x128xf32>
      %132 = arith.addf %105, %124 : vector<8x128xf32>
      %133 = arith.addf %106, %127 : vector<8x128xf32>
      %c5_13 = arith.constant 5 : index
      %134 = arith.index_cast %4 : i32 to index
      %c0_14 = arith.constant 0 : index
      %135 = vector.load %arg2[%c5_13, %134, %c0_14] : memref<8x16x128xf32, #tpu.memory_space<vmem>>, vector<1x8x128xf32>
      %136 = vector.shape_cast %135 : vector<1x8x128xf32> to vector<8x128xf32>
      %c30 = arith.constant 30 : index
      %137 = memref.load %arg1[%c30] : memref<95xf32, #tpu.memory_space<smem>>
      %138 = vector.broadcast %137 : f32 to vector<8x128xf32>
      %139 = arith.mulf %136, %138 : vector<8x128xf32>
      %c31 = arith.constant 31 : index
      %140 = memref.load %arg1[%c31] : memref<95xf32, #tpu.memory_space<smem>>
      %141 = vector.broadcast %140 : f32 to vector<8x128xf32>
      %142 = arith.mulf %136, %141 : vector<8x128xf32>
      %c32 = arith.constant 32 : index
      %143 = memref.load %arg1[%c32] : memref<95xf32, #tpu.memory_space<smem>>
      %144 = vector.broadcast %143 : f32 to vector<8x128xf32>
      %145 = arith.mulf %136, %144 : vector<8x128xf32>
      %c33 = arith.constant 33 : index
      %146 = memref.load %arg1[%c33] : memref<95xf32, #tpu.memory_space<smem>>
      %147 = vector.broadcast %146 : f32 to vector<8x128xf32>
      %148 = arith.mulf %136, %147 : vector<8x128xf32>
      %c34 = arith.constant 34 : index
      %149 = memref.load %arg1[%c34] : memref<95xf32, #tpu.memory_space<smem>>
      %150 = vector.broadcast %149 : f32 to vector<8x128xf32>
      %151 = arith.mulf %136, %150 : vector<8x128xf32>
      %c35 = arith.constant 35 : index
      %152 = memref.load %arg1[%c35] : memref<95xf32, #tpu.memory_space<smem>>
      %153 = vector.broadcast %152 : f32 to vector<8x128xf32>
      %154 = arith.mulf %136, %153 : vector<8x128xf32>
      %155 = arith.addf %128, %139 : vector<8x128xf32>
      %156 = arith.addf %129, %142 : vector<8x128xf32>
      %157 = arith.addf %130, %145 : vector<8x128xf32>
      %158 = arith.addf %131, %148 : vector<8x128xf32>
      %159 = arith.addf %132, %151 : vector<8x128xf32>
      %160 = arith.addf %133, %154 : vector<8x128xf32>
      %c6_15 = arith.constant 6 : index
      %161 = arith.index_cast %4 : i32 to index
      %c0_16 = arith.constant 0 : index
      %162 = vector.load %arg2[%c6_15, %161, %c0_16] : memref<8x16x128xf32, #tpu.memory_space<vmem>>, vector<1x8x128xf32>
      %163 = vector.shape_cast %162 : vector<1x8x128xf32> to vector<8x128xf32>
      %c36 = arith.constant 36 : index
      %164 = memref.load %arg1[%c36] : memref<95xf32, #tpu.memory_space<smem>>
      %165 = vector.broadcast %164 : f32 to vector<8x128xf32>
      %166 = arith.mulf %163, %165 : vector<8x128xf32>
      %c37 = arith.constant 37 : index
      %167 = memref.load %arg1[%c37] : memref<95xf32, #tpu.memory_space<smem>>
      %168 = vector.broadcast %167 : f32 to vector<8x128xf32>
      %169 = arith.mulf %163, %168 : vector<8x128xf32>
      %c38 = arith.constant 38 : index
      %170 = memref.load %arg1[%c38] : memref<95xf32, #tpu.memory_space<smem>>
      %171 = vector.broadcast %170 : f32 to vector<8x128xf32>
      %172 = arith.mulf %163, %171 : vector<8x128xf32>
      %c39 = arith.constant 39 : index
      %173 = memref.load %arg1[%c39] : memref<95xf32, #tpu.memory_space<smem>>
      %174 = vector.broadcast %173 : f32 to vector<8x128xf32>
      %175 = arith.mulf %163, %174 : vector<8x128xf32>
      %c40 = arith.constant 40 : index
      %176 = memref.load %arg1[%c40] : memref<95xf32, #tpu.memory_space<smem>>
      %177 = vector.broadcast %176 : f32 to vector<8x128xf32>
      %178 = arith.mulf %163, %177 : vector<8x128xf32>
      %c41 = arith.constant 41 : index
      %179 = memref.load %arg1[%c41] : memref<95xf32, #tpu.memory_space<smem>>
      %180 = vector.broadcast %179 : f32 to vector<8x128xf32>
      %181 = arith.mulf %163, %180 : vector<8x128xf32>
      %182 = arith.addf %155, %166 : vector<8x128xf32>
      %183 = arith.addf %156, %169 : vector<8x128xf32>
      %184 = arith.addf %157, %172 : vector<8x128xf32>
      %185 = arith.addf %158, %175 : vector<8x128xf32>
      %186 = arith.addf %159, %178 : vector<8x128xf32>
      %187 = arith.addf %160, %181 : vector<8x128xf32>
      %c7_17 = arith.constant 7 : index
      %188 = arith.index_cast %4 : i32 to index
      %c0_18 = arith.constant 0 : index
      %189 = vector.load %arg2[%c7_17, %188, %c0_18] : memref<8x16x128xf32, #tpu.memory_space<vmem>>, vector<1x8x128xf32>
      %190 = vector.shape_cast %189 : vector<1x8x128xf32> to vector<8x128xf32>
      %c42 = arith.constant 42 : index
      %191 = memref.load %arg1[%c42] : memref<95xf32, #tpu.memory_space<smem>>
      %192 = vector.broadcast %191 : f32 to vector<8x128xf32>
      %193 = arith.mulf %190, %192 : vector<8x128xf32>
      %c43 = arith.constant 43 : index
      %194 = memref.load %arg1[%c43] : memref<95xf32, #tpu.memory_space<smem>>
      %195 = vector.broadcast %194 : f32 to vector<8x128xf32>
      %196 = arith.mulf %190, %195 : vector<8x128xf32>
      %c44 = arith.constant 44 : index
      %197 = memref.load %arg1[%c44] : memref<95xf32, #tpu.memory_space<smem>>
      %198 = vector.broadcast %197 : f32 to vector<8x128xf32>
      %199 = arith.mulf %190, %198 : vector<8x128xf32>
      %c45 = arith.constant 45 : index
      %200 = memref.load %arg1[%c45] : memref<95xf32, #tpu.memory_space<smem>>
      %201 = vector.broadcast %200 : f32 to vector<8x128xf32>
      %202 = arith.mulf %190, %201 : vector<8x128xf32>
      %c46 = arith.constant 46 : index
      %203 = memref.load %arg1[%c46] : memref<95xf32, #tpu.memory_space<smem>>
      %204 = vector.broadcast %203 : f32 to vector<8x128xf32>
      %205 = arith.mulf %190, %204 : vector<8x128xf32>
      %c47 = arith.constant 47 : index
      %206 = memref.load %arg1[%c47] : memref<95xf32, #tpu.memory_space<smem>>
      %207 = vector.broadcast %206 : f32 to vector<8x128xf32>
      %208 = arith.mulf %190, %207 : vector<8x128xf32>
      %209 = arith.addf %182, %193 : vector<8x128xf32>
      %210 = arith.addf %183, %196 : vector<8x128xf32>
      %211 = arith.addf %184, %199 : vector<8x128xf32>
      %212 = arith.addf %185, %202 : vector<8x128xf32>
      %213 = arith.addf %186, %205 : vector<8x128xf32>
      %214 = arith.addf %187, %208 : vector<8x128xf32>
      %c48 = arith.constant 48 : index
      %215 = memref.load %arg1[%c48] : memref<95xf32, #tpu.memory_space<smem>>
      %216 = vector.broadcast %215 : f32 to vector<8x128xf32>
      %217 = arith.addf %209, %216 : vector<8x128xf32>
      %cst = arith.constant 5.000000e-01 : f32
      %218 = vector.broadcast %cst : f32 to vector<8x128xf32>
      %219 = arith.mulf %218, %217 : vector<8x128xf32>
      %220 = math.tanh %219 : vector<8x128xf32>
      %cst_19 = arith.constant 5.000000e-01 : f32
      %221 = vector.broadcast %cst_19 : f32 to vector<8x128xf32>
      %222 = arith.mulf %221, %220 : vector<8x128xf32>
      %cst_20 = arith.constant 5.000000e-01 : f32
      %223 = vector.broadcast %cst_20 : f32 to vector<8x128xf32>
      %224 = arith.addf %222, %223 : vector<8x128xf32>
      %c49 = arith.constant 49 : index
      %225 = memref.load %arg1[%c49] : memref<95xf32, #tpu.memory_space<smem>>
      %226 = vector.broadcast %225 : f32 to vector<8x128xf32>
      %227 = arith.addf %210, %226 : vector<8x128xf32>
      %cst_21 = arith.constant 5.000000e-01 : f32
      %228 = vector.broadcast %cst_21 : f32 to vector<8x128xf32>
      %229 = arith.mulf %228, %227 : vector<8x128xf32>
      %230 = math.tanh %229 : vector<8x128xf32>
      %cst_22 = arith.constant 5.000000e-01 : f32
      %231 = vector.broadcast %cst_22 : f32 to vector<8x128xf32>
      %232 = arith.mulf %231, %230 : vector<8x128xf32>
      %cst_23 = arith.constant 5.000000e-01 : f32
      %233 = vector.broadcast %cst_23 : f32 to vector<8x128xf32>
      %234 = arith.addf %232, %233 : vector<8x128xf32>
      %c50 = arith.constant 50 : index
      %235 = memref.load %arg1[%c50] : memref<95xf32, #tpu.memory_space<smem>>
      %236 = vector.broadcast %235 : f32 to vector<8x128xf32>
      %237 = arith.addf %211, %236 : vector<8x128xf32>
      %cst_24 = arith.constant 5.000000e-01 : f32
      %238 = vector.broadcast %cst_24 : f32 to vector<8x128xf32>
      %239 = arith.mulf %238, %237 : vector<8x128xf32>
      %240 = math.tanh %239 : vector<8x128xf32>
      %cst_25 = arith.constant 5.000000e-01 : f32
      %241 = vector.broadcast %cst_25 : f32 to vector<8x128xf32>
      %242 = arith.mulf %241, %240 : vector<8x128xf32>
      %cst_26 = arith.constant 5.000000e-01 : f32
      %243 = vector.broadcast %cst_26 : f32 to vector<8x128xf32>
      %244 = arith.addf %242, %243 : vector<8x128xf32>
      %c51 = arith.constant 51 : index
      %245 = memref.load %arg1[%c51] : memref<95xf32, #tpu.memory_space<smem>>
      %246 = vector.broadcast %245 : f32 to vector<8x128xf32>
      %247 = arith.addf %212, %246 : vector<8x128xf32>
      %cst_27 = arith.constant 5.000000e-01 : f32
      %248 = vector.broadcast %cst_27 : f32 to vector<8x128xf32>
      %249 = arith.mulf %248, %247 : vector<8x128xf32>
      %250 = math.tanh %249 : vector<8x128xf32>
      %cst_28 = arith.constant 5.000000e-01 : f32
      %251 = vector.broadcast %cst_28 : f32 to vector<8x128xf32>
      %252 = arith.mulf %251, %250 : vector<8x128xf32>
      %cst_29 = arith.constant 5.000000e-01 : f32
      %253 = vector.broadcast %cst_29 : f32 to vector<8x128xf32>
      %254 = arith.addf %252, %253 : vector<8x128xf32>
      %c52 = arith.constant 52 : index
      %255 = memref.load %arg1[%c52] : memref<95xf32, #tpu.memory_space<smem>>
      %256 = vector.broadcast %255 : f32 to vector<8x128xf32>
      %257 = arith.addf %213, %256 : vector<8x128xf32>
      %cst_30 = arith.constant 5.000000e-01 : f32
      %258 = vector.broadcast %cst_30 : f32 to vector<8x128xf32>
      %259 = arith.mulf %258, %257 : vector<8x128xf32>
      %260 = math.tanh %259 : vector<8x128xf32>
      %cst_31 = arith.constant 5.000000e-01 : f32
      %261 = vector.broadcast %cst_31 : f32 to vector<8x128xf32>
      %262 = arith.mulf %261, %260 : vector<8x128xf32>
      %cst_32 = arith.constant 5.000000e-01 : f32
      %263 = vector.broadcast %cst_32 : f32 to vector<8x128xf32>
      %264 = arith.addf %262, %263 : vector<8x128xf32>
      %c53 = arith.constant 53 : index
      %265 = memref.load %arg1[%c53] : memref<95xf32, #tpu.memory_space<smem>>
      %266 = vector.broadcast %265 : f32 to vector<8x128xf32>
      %267 = arith.addf %214, %266 : vector<8x128xf32>
      %cst_33 = arith.constant 5.000000e-01 : f32
      %268 = vector.broadcast %cst_33 : f32 to vector<8x128xf32>
      %269 = arith.mulf %268, %267 : vector<8x128xf32>
      %270 = math.tanh %269 : vector<8x128xf32>
      %cst_34 = arith.constant 5.000000e-01 : f32
      %271 = vector.broadcast %cst_34 : f32 to vector<8x128xf32>
      %272 = arith.mulf %271, %270 : vector<8x128xf32>
      %cst_35 = arith.constant 5.000000e-01 : f32
      %273 = vector.broadcast %cst_35 : f32 to vector<8x128xf32>
      %274 = arith.addf %272, %273 : vector<8x128xf32>
      %c54 = arith.constant 54 : index
      %275 = memref.load %arg1[%c54] : memref<95xf32, #tpu.memory_space<smem>>
      %276 = vector.broadcast %275 : f32 to vector<8x128xf32>
      %277 = arith.mulf %224, %276 : vector<8x128xf32>
      %c55 = arith.constant 55 : index
      %278 = memref.load %arg1[%c55] : memref<95xf32, #tpu.memory_space<smem>>
      %279 = vector.broadcast %278 : f32 to vector<8x128xf32>
      %280 = arith.mulf %224, %279 : vector<8x128xf32>
      %c56 = arith.constant 56 : index
      %281 = memref.load %arg1[%c56] : memref<95xf32, #tpu.memory_space<smem>>
      %282 = vector.broadcast %281 : f32 to vector<8x128xf32>
      %283 = arith.mulf %224, %282 : vector<8x128xf32>
      %c57 = arith.constant 57 : index
      %284 = memref.load %arg1[%c57] : memref<95xf32, #tpu.memory_space<smem>>
      %285 = vector.broadcast %284 : f32 to vector<8x128xf32>
      %286 = arith.mulf %224, %285 : vector<8x128xf32>
      %c58 = arith.constant 58 : index
      %287 = memref.load %arg1[%c58] : memref<95xf32, #tpu.memory_space<smem>>
      %288 = vector.broadcast %287 : f32 to vector<8x128xf32>
      %289 = arith.mulf %234, %288 : vector<8x128xf32>
      %c59 = arith.constant 59 : index
      %290 = memref.load %arg1[%c59] : memref<95xf32, #tpu.memory_space<smem>>
      %291 = vector.broadcast %290 : f32 to vector<8x128xf32>
      %292 = arith.mulf %234, %291 : vector<8x128xf32>
      %c60 = arith.constant 60 : index
      %293 = memref.load %arg1[%c60] : memref<95xf32, #tpu.memory_space<smem>>
      %294 = vector.broadcast %293 : f32 to vector<8x128xf32>
      %295 = arith.mulf %234, %294 : vector<8x128xf32>
      %c61 = arith.constant 61 : index
      %296 = memref.load %arg1[%c61] : memref<95xf32, #tpu.memory_space<smem>>
      %297 = vector.broadcast %296 : f32 to vector<8x128xf32>
      %298 = arith.mulf %234, %297 : vector<8x128xf32>
      %299 = arith.addf %277, %289 : vector<8x128xf32>
      %300 = arith.addf %280, %292 : vector<8x128xf32>
      %301 = arith.addf %283, %295 : vector<8x128xf32>
      %302 = arith.addf %286, %298 : vector<8x128xf32>
      %c62 = arith.constant 62 : index
      %303 = memref.load %arg1[%c62] : memref<95xf32, #tpu.memory_space<smem>>
      %304 = vector.broadcast %303 : f32 to vector<8x128xf32>
      %305 = arith.mulf %244, %304 : vector<8x128xf32>
      %c63 = arith.constant 63 : index
      %306 = memref.load %arg1[%c63] : memref<95xf32, #tpu.memory_space<smem>>
      %307 = vector.broadcast %306 : f32 to vector<8x128xf32>
      %308 = arith.mulf %244, %307 : vector<8x128xf32>
      %c64 = arith.constant 64 : index
      %309 = memref.load %arg1[%c64] : memref<95xf32, #tpu.memory_space<smem>>
      %310 = vector.broadcast %309 : f32 to vector<8x128xf32>
      %311 = arith.mulf %244, %310 : vector<8x128xf32>
      %c65 = arith.constant 65 : index
      %312 = memref.load %arg1[%c65] : memref<95xf32, #tpu.memory_space<smem>>
      %313 = vector.broadcast %312 : f32 to vector<8x128xf32>
      %314 = arith.mulf %244, %313 : vector<8x128xf32>
      %315 = arith.addf %299, %305 : vector<8x128xf32>
      %316 = arith.addf %300, %308 : vector<8x128xf32>
      %317 = arith.addf %301, %311 : vector<8x128xf32>
      %318 = arith.addf %302, %314 : vector<8x128xf32>
      %c66 = arith.constant 66 : index
      %319 = memref.load %arg1[%c66] : memref<95xf32, #tpu.memory_space<smem>>
      %320 = vector.broadcast %319 : f32 to vector<8x128xf32>
      %321 = arith.mulf %254, %320 : vector<8x128xf32>
      %c67 = arith.constant 67 : index
      %322 = memref.load %arg1[%c67] : memref<95xf32, #tpu.memory_space<smem>>
      %323 = vector.broadcast %322 : f32 to vector<8x128xf32>
      %324 = arith.mulf %254, %323 : vector<8x128xf32>
      %c68 = arith.constant 68 : index
      %325 = memref.load %arg1[%c68] : memref<95xf32, #tpu.memory_space<smem>>
      %326 = vector.broadcast %325 : f32 to vector<8x128xf32>
      %327 = arith.mulf %254, %326 : vector<8x128xf32>
      %c69 = arith.constant 69 : index
      %328 = memref.load %arg1[%c69] : memref<95xf32, #tpu.memory_space<smem>>
      %329 = vector.broadcast %328 : f32 to vector<8x128xf32>
      %330 = arith.mulf %254, %329 : vector<8x128xf32>
      %331 = arith.addf %315, %321 : vector<8x128xf32>
      %332 = arith.addf %316, %324 : vector<8x128xf32>
      %333 = arith.addf %317, %327 : vector<8x128xf32>
      %334 = arith.addf %318, %330 : vector<8x128xf32>
      %c70 = arith.constant 70 : index
      %335 = memref.load %arg1[%c70] : memref<95xf32, #tpu.memory_space<smem>>
      %336 = vector.broadcast %335 : f32 to vector<8x128xf32>
      %337 = arith.mulf %264, %336 : vector<8x128xf32>
      %c71 = arith.constant 71 : index
      %338 = memref.load %arg1[%c71] : memref<95xf32, #tpu.memory_space<smem>>
      %339 = vector.broadcast %338 : f32 to vector<8x128xf32>
      %340 = arith.mulf %264, %339 : vector<8x128xf32>
      %c72 = arith.constant 72 : index
      %341 = memref.load %arg1[%c72] : memref<95xf32, #tpu.memory_space<smem>>
      %342 = vector.broadcast %341 : f32 to vector<8x128xf32>
      %343 = arith.mulf %264, %342 : vector<8x128xf32>
      %c73 = arith.constant 73 : index
      %344 = memref.load %arg1[%c73] : memref<95xf32, #tpu.memory_space<smem>>
      %345 = vector.broadcast %344 : f32 to vector<8x128xf32>
      %346 = arith.mulf %264, %345 : vector<8x128xf32>
      %347 = arith.addf %331, %337 : vector<8x128xf32>
      %348 = arith.addf %332, %340 : vector<8x128xf32>
      %349 = arith.addf %333, %343 : vector<8x128xf32>
      %350 = arith.addf %334, %346 : vector<8x128xf32>
      %c74 = arith.constant 74 : index
      %351 = memref.load %arg1[%c74] : memref<95xf32, #tpu.memory_space<smem>>
      %352 = vector.broadcast %351 : f32 to vector<8x128xf32>
      %353 = arith.mulf %274, %352 : vector<8x128xf32>
      %c75 = arith.constant 75 : index
      %354 = memref.load %arg1[%c75] : memref<95xf32, #tpu.memory_space<smem>>
      %355 = vector.broadcast %354 : f32 to vector<8x128xf32>
      %356 = arith.mulf %274, %355 : vector<8x128xf32>
      %c76 = arith.constant 76 : index
      %357 = memref.load %arg1[%c76] : memref<95xf32, #tpu.memory_space<smem>>
      %358 = vector.broadcast %357 : f32 to vector<8x128xf32>
      %359 = arith.mulf %274, %358 : vector<8x128xf32>
      %c77 = arith.constant 77 : index
      %360 = memref.load %arg1[%c77] : memref<95xf32, #tpu.memory_space<smem>>
      %361 = vector.broadcast %360 : f32 to vector<8x128xf32>
      %362 = arith.mulf %274, %361 : vector<8x128xf32>
      %363 = arith.addf %347, %353 : vector<8x128xf32>
      %364 = arith.addf %348, %356 : vector<8x128xf32>
      %365 = arith.addf %349, %359 : vector<8x128xf32>
      %366 = arith.addf %350, %362 : vector<8x128xf32>
      %c78 = arith.constant 78 : index
      %367 = memref.load %arg1[%c78] : memref<95xf32, #tpu.memory_space<smem>>
      %368 = vector.broadcast %367 : f32 to vector<8x128xf32>
      %369 = arith.addf %363, %368 : vector<8x128xf32>
      %cst_36 = arith.constant 5.000000e-01 : f32
      %370 = vector.broadcast %cst_36 : f32 to vector<8x128xf32>
      %371 = arith.mulf %370, %369 : vector<8x128xf32>
      %372 = math.tanh %371 : vector<8x128xf32>
      %cst_37 = arith.constant 5.000000e-01 : f32
      %373 = vector.broadcast %cst_37 : f32 to vector<8x128xf32>
      %374 = arith.mulf %373, %372 : vector<8x128xf32>
      %cst_38 = arith.constant 5.000000e-01 : f32
      %375 = vector.broadcast %cst_38 : f32 to vector<8x128xf32>
      %376 = arith.addf %374, %375 : vector<8x128xf32>
      %c79 = arith.constant 79 : index
      %377 = memref.load %arg1[%c79] : memref<95xf32, #tpu.memory_space<smem>>
      %378 = vector.broadcast %377 : f32 to vector<8x128xf32>
      %379 = arith.addf %364, %378 : vector<8x128xf32>
      %cst_39 = arith.constant 5.000000e-01 : f32
      %380 = vector.broadcast %cst_39 : f32 to vector<8x128xf32>
      %381 = arith.mulf %380, %379 : vector<8x128xf32>
      %382 = math.tanh %381 : vector<8x128xf32>
      %cst_40 = arith.constant 5.000000e-01 : f32
      %383 = vector.broadcast %cst_40 : f32 to vector<8x128xf32>
      %384 = arith.mulf %383, %382 : vector<8x128xf32>
      %cst_41 = arith.constant 5.000000e-01 : f32
      %385 = vector.broadcast %cst_41 : f32 to vector<8x128xf32>
      %386 = arith.addf %384, %385 : vector<8x128xf32>
      %c80 = arith.constant 80 : index
      %387 = memref.load %arg1[%c80] : memref<95xf32, #tpu.memory_space<smem>>
      %388 = vector.broadcast %387 : f32 to vector<8x128xf32>
      %389 = arith.addf %365, %388 : vector<8x128xf32>
      %cst_42 = arith.constant 5.000000e-01 : f32
      %390 = vector.broadcast %cst_42 : f32 to vector<8x128xf32>
      %391 = arith.mulf %390, %389 : vector<8x128xf32>
      %392 = math.tanh %391 : vector<8x128xf32>
      %cst_43 = arith.constant 5.000000e-01 : f32
      %393 = vector.broadcast %cst_43 : f32 to vector<8x128xf32>
      %394 = arith.mulf %393, %392 : vector<8x128xf32>
      %cst_44 = arith.constant 5.000000e-01 : f32
      %395 = vector.broadcast %cst_44 : f32 to vector<8x128xf32>
      %396 = arith.addf %394, %395 : vector<8x128xf32>
      %c81 = arith.constant 81 : index
      %397 = memref.load %arg1[%c81] : memref<95xf32, #tpu.memory_space<smem>>
      %398 = vector.broadcast %397 : f32 to vector<8x128xf32>
      %399 = arith.addf %366, %398 : vector<8x128xf32>
      %cst_45 = arith.constant 5.000000e-01 : f32
      %400 = vector.broadcast %cst_45 : f32 to vector<8x128xf32>
      %401 = arith.mulf %400, %399 : vector<8x128xf32>
      %402 = math.tanh %401 : vector<8x128xf32>
      %cst_46 = arith.constant 5.000000e-01 : f32
      %403 = vector.broadcast %cst_46 : f32 to vector<8x128xf32>
      %404 = arith.mulf %403, %402 : vector<8x128xf32>
      %cst_47 = arith.constant 5.000000e-01 : f32
      %405 = vector.broadcast %cst_47 : f32 to vector<8x128xf32>
      %406 = arith.addf %404, %405 : vector<8x128xf32>
      %c82 = arith.constant 82 : index
      %407 = memref.load %arg1[%c82] : memref<95xf32, #tpu.memory_space<smem>>
      %408 = vector.broadcast %407 : f32 to vector<8x128xf32>
      %409 = arith.mulf %376, %408 : vector<8x128xf32>
      %c83 = arith.constant 83 : index
      %410 = memref.load %arg1[%c83] : memref<95xf32, #tpu.memory_space<smem>>
      %411 = vector.broadcast %410 : f32 to vector<8x128xf32>
      %412 = arith.mulf %376, %411 : vector<8x128xf32>
      %c84 = arith.constant 84 : index
      %413 = memref.load %arg1[%c84] : memref<95xf32, #tpu.memory_space<smem>>
      %414 = vector.broadcast %413 : f32 to vector<8x128xf32>
      %415 = arith.mulf %386, %414 : vector<8x128xf32>
      %c85 = arith.constant 85 : index
      %416 = memref.load %arg1[%c85] : memref<95xf32, #tpu.memory_space<smem>>
      %417 = vector.broadcast %416 : f32 to vector<8x128xf32>
      %418 = arith.mulf %386, %417 : vector<8x128xf32>
      %419 = arith.addf %409, %415 : vector<8x128xf32>
      %420 = arith.addf %412, %418 : vector<8x128xf32>
      %c86 = arith.constant 86 : index
      %421 = memref.load %arg1[%c86] : memref<95xf32, #tpu.memory_space<smem>>
      %422 = vector.broadcast %421 : f32 to vector<8x128xf32>
      %423 = arith.mulf %396, %422 : vector<8x128xf32>
      %c87 = arith.constant 87 : index
      %424 = memref.load %arg1[%c87] : memref<95xf32, #tpu.memory_space<smem>>
      %425 = vector.broadcast %424 : f32 to vector<8x128xf32>
      %426 = arith.mulf %396, %425 : vector<8x128xf32>
      %427 = arith.addf %419, %423 : vector<8x128xf32>
      %428 = arith.addf %420, %426 : vector<8x128xf32>
      %c88 = arith.constant 88 : index
      %429 = memref.load %arg1[%c88] : memref<95xf32, #tpu.memory_space<smem>>
      %430 = vector.broadcast %429 : f32 to vector<8x128xf32>
      %431 = arith.mulf %406, %430 : vector<8x128xf32>
      %c89 = arith.constant 89 : index
      %432 = memref.load %arg1[%c89] : memref<95xf32, #tpu.memory_space<smem>>
      %433 = vector.broadcast %432 : f32 to vector<8x128xf32>
      %434 = arith.mulf %406, %433 : vector<8x128xf32>
      %435 = arith.addf %427, %431 : vector<8x128xf32>
      %436 = arith.addf %428, %434 : vector<8x128xf32>
      %c90 = arith.constant 90 : index
      %437 = memref.load %arg1[%c90] : memref<95xf32, #tpu.memory_space<smem>>
      %438 = vector.broadcast %437 : f32 to vector<8x128xf32>
      %439 = arith.addf %435, %438 : vector<8x128xf32>
      %cst_48 = arith.constant 5.000000e-01 : f32
      %440 = vector.broadcast %cst_48 : f32 to vector<8x128xf32>
      %441 = arith.mulf %440, %439 : vector<8x128xf32>
      %442 = math.tanh %441 : vector<8x128xf32>
      %cst_49 = arith.constant 5.000000e-01 : f32
      %443 = vector.broadcast %cst_49 : f32 to vector<8x128xf32>
      %444 = arith.mulf %443, %442 : vector<8x128xf32>
      %cst_50 = arith.constant 5.000000e-01 : f32
      %445 = vector.broadcast %cst_50 : f32 to vector<8x128xf32>
      %446 = arith.addf %444, %445 : vector<8x128xf32>
      %c91 = arith.constant 91 : index
      %447 = memref.load %arg1[%c91] : memref<95xf32, #tpu.memory_space<smem>>
      %448 = vector.broadcast %447 : f32 to vector<8x128xf32>
      %449 = arith.addf %436, %448 : vector<8x128xf32>
      %cst_51 = arith.constant 5.000000e-01 : f32
      %450 = vector.broadcast %cst_51 : f32 to vector<8x128xf32>
      %451 = arith.mulf %450, %449 : vector<8x128xf32>
      %452 = math.tanh %451 : vector<8x128xf32>
      %cst_52 = arith.constant 5.000000e-01 : f32
      %453 = vector.broadcast %cst_52 : f32 to vector<8x128xf32>
      %454 = arith.mulf %453, %452 : vector<8x128xf32>
      %cst_53 = arith.constant 5.000000e-01 : f32
      %455 = vector.broadcast %cst_53 : f32 to vector<8x128xf32>
      %456 = arith.addf %454, %455 : vector<8x128xf32>
      %c92 = arith.constant 92 : index
      %457 = memref.load %arg1[%c92] : memref<95xf32, #tpu.memory_space<smem>>
      %458 = vector.broadcast %457 : f32 to vector<8x128xf32>
      %459 = arith.mulf %446, %458 : vector<8x128xf32>
      %c93 = arith.constant 93 : index
      %460 = memref.load %arg1[%c93] : memref<95xf32, #tpu.memory_space<smem>>
      %461 = vector.broadcast %460 : f32 to vector<8x128xf32>
      %462 = arith.mulf %456, %461 : vector<8x128xf32>
      %463 = arith.addf %459, %462 : vector<8x128xf32>
      %c94 = arith.constant 94 : index
      %464 = memref.load %arg1[%c94] : memref<95xf32, #tpu.memory_space<smem>>
      %465 = vector.broadcast %464 : f32 to vector<8x128xf32>
      %466 = arith.addf %463, %465 : vector<8x128xf32>
      %cst_54 = arith.constant 5.000000e-01 : f32
      %467 = vector.broadcast %cst_54 : f32 to vector<8x128xf32>
      %468 = arith.mulf %467, %466 : vector<8x128xf32>
      %469 = math.tanh %468 : vector<8x128xf32>
      %cst_55 = arith.constant 5.000000e-01 : f32
      %470 = vector.broadcast %cst_55 : f32 to vector<8x128xf32>
      %471 = arith.mulf %470, %469 : vector<8x128xf32>
      %cst_56 = arith.constant 5.000000e-01 : f32
      %472 = vector.broadcast %cst_56 : f32 to vector<8x128xf32>
      %473 = arith.addf %471, %472 : vector<8x128xf32>
      %474 = arith.index_cast %4 : i32 to index
      %c0_57 = arith.constant 0 : index
      %475 = vector.load %arg3[%474, %c0_57] : memref<16x128xf32, #tpu.memory_space<vmem>>, vector<8x128xf32>
      tpu.vector_store %arg3[%474, %c0_57], %473 {strides = array<i32>} : memref<16x128xf32, #tpu.memory_space<vmem>>, vector<8x128xf32>,
    }
    %c2_i32_0 = arith.constant 2 : i32
    return
  }
  func.func @transform_0(%arg0: i32) -> i32 {
    %c0_i32 = arith.constant 0 : i32
    %c0_i32_0 = arith.constant 0 : i32
    return %c0_i32 : i32
  }
  func.func @transform_1(%arg0: i32) -> (i32, i32, i32) {
    %c0_i32 = arith.constant 0 : i32
    %c0_i32_0 = arith.constant 0 : i32
    %c0_i32_1 = arith.constant 0 : i32
    return %c0_i32, %arg0, %c0_i32_0 : i32, i32, i32
  }
  func.func @transform_2(%arg0: i32) -> (i32, i32) {
    %c0_i32 = arith.constant 0 : i32
    %c0_i32_0 = arith.constant 0 : i32
    return %arg0, %c0_i32 : i32, i32
  }
}

</mosaic_0001>

<llo_original>
// kernel: mlp_forward.1
$region0: #{mlp_forward.1}
  #allocation0 [shape = 'u32[]', space=smem, size = 0x4, offset = 0x4, fixed_abs, tag = 'smem constant byte address 0x4 - core index']
  #allocation1 [shape = 'u32[144,128]{1,0:T(1,128)}', space=vmem, size = 0x12000, scoped, tag = 'internal scratch']
  %s0 = inlined_call_operand.vmem [shape: f32[95], index: 0, kind: input, shape index: {}]
  %s1 = inlined_call_operand.vmem [shape: f32[8,16,128], index: 1, kind: input, shape index: {}]
  %s2 = inlined_call_operand.hbm [shape: f32[16,128], index: 2, kind: output, shape index: {}]
  %s3 = sld [smem:[#allocation0]]
  $region29: #{mlp_forward.1} parent=0
    _
  %s5 = ssub.s32 1, %s3
  %s6 = scalar_select 0, %s5, %s3
  $region1: #{mlp_forward.1} parent=0
    #allocation2 [shape = 'u8[512]{0}', space=smem, size = 0x200, scoped, tag = 'input window, operand 0, single buffered']
    #allocation3 [shape = 's32[1]{0}', space=sflag, size = 0x4, scoped, tag = 'scoped memory for mlp_forward.1']
    #allocation4 [shape = 's32[1]{0}', space=sflag, size = 0x4, scoped, tag = 'scoped memory for mlp_forward.1']
    #allocation5 [shape = 'u8[8192]{0}', space=vmem, size = 0x2000, scoped, tag = 'output window, operand 0, single buffered']
    %7 = vsyncpa [#allocation4], 0
    %8 = vsyncpa [#allocation3], 0
    // Predicated region
    $region2: #{mlp_forward.1} parent=1 // pred_check
      _
    $region3: #{mlp_forward.1} parent=1 // pred_check_branch
      %10 = sbr.rel (0) target = $region5
    $region4: #{mlp_forward.1} parent=1 // pred_region
      %s12 = ssub.s32 16, 16
      %13 = vsyncadd [#allocation4], %s12
      %s15 = sshll.u32 %s0, 4
      %s16 = int_to_ptr.vmem [resolvable:$true] %s15
      %18 = dma.vmem_to_smem %s16, 16, [#allocation2], [#allocation4]
    $region5: #{mlp_forward.1} parent=1 // pred_fallthru
      _
    // Predicated region
    $region6: #{mlp_forward.1} parent=1 // pred_check
      _
    $region7: #{mlp_forward.1} parent=1 // pred_check_branch
      %20 = sbr.rel (0) target = $region9
    $region8: #{mlp_forward.1} parent=1 // pred_region
      _
    $region9: #{mlp_forward.1} parent=1 // pred_fallthru
      _
    // Predicated region
    $region10: #{mlp_forward.1} parent=1 // pred_check
      _
    $region11: #{mlp_forward.1} parent=1 // pred_check_branch
      %22 = sbr.rel (0) target = $region13
    $region12: #{mlp_forward.1} parent=1 // pred_region
      %23 = dma.done [#allocation4], 16
    $region13: #{mlp_forward.1} parent=1 // pred_fallthru
      _
    %24 = sfence
    loop: start=0, step=1, limit=2
    $region14: #{mlp_forward.1} parent=1 // loop_pre_header
      _
    $region15: #{mlp_forward.1} parent=1 // loop_header
      %s26 = sphi 0, %s30
      %p27 = scmp.ge.s32.totalorder %s26, 2
    $region16: #{mlp_forward.1} parent=1 // loop_header_branch
      %29 = sbr.rel (%p27) target = $region20
    $region17: #{mlp_forward.1} parent=1 // loop_body
      %s31 = smul.u32 %s26, 8
      %s32 = scalar_lea.vmem %s1, %s31
      %v33 = vld [vmem:[%s32] sm:$0xff]
      %s34 = sld [smem:[#allocation2]]
      %v35 = vstv %s34
      %v36 = vmul.f32 %v33, %v35
      %s37 = sld [smem:[#allocation2 + $0x1]]
      %v38 = vstv %s37
      %v39 = vmul.f32 %v33, %v38
      %s40 = sld [smem:[#allocation2 + $0x2]]
      %v41 = vstv %s40
      %v42 = vmul.f32 %v33, %v41
      %s43 = sld [smem:[#allocation2 + $0x3]]
      %v44 = vstv %s43
      %v45 = vmul.f32 %v33, %v44
      %s46 = sld [smem:[#allocation2 + $0x4]]
      %v47 = vstv %s46
      %v48 = vmul.f32 %v33, %v47
      %s49 = sld [smem:[#allocation2 + $0x5]]
      %v50 = vstv %s49
      %v51 = vmul.f32 %v33, %v50
      %s52 = sadd.s32 %s31, 16
      %s53 = scalar_lea.vmem %s1, %s52
      %v54 = vld [vmem:[%s53] sm:$0xff]
      %s55 = sld [smem:[#allocation2 + $0x6]]
      %v56 = vstv %s55
      %v57 = vmul.f32 %v54, %v56
      %s58 = sld [smem:[#allocation2 + $0x7]]
      %v59 = vstv %s58
      %v60 = vmul.f32 %v54, %v59
      %s61 = sld [smem:[#allocation2 + $0x8]]
      %v62 = vstv %s61
      %v63 = vmul.f32 %v54, %v62
      %s64 = sld [smem:[#allocation2 + $0x9]]
      %v65 = vstv %s64
      %v66 = vmul.f32 %v54, %v65
      %s67 = sld [smem:[#allocation2 + $0xa]]
      %v68 = vstv %s67
      %v69 = vmul.f32 %v54, %v68
      %s70 = sld [smem:[#allocation2 + $0xb]]
      %v71 = vstv %s70
      %v72 = vmul.f32 %v54, %v71
      %v73 = vadd.f32 %v36, %v57
      %v74 = vadd.f32 %v39, %v60
      %v75 = vadd.f32 %v42, %v63
      %v76 = vadd.f32 %v45, %v66
      %v77 = vadd.f32 %v48, %v69
      %v78 = vadd.f32 %v51, %v72
      %s79 = sadd.s32 %s31, 32
      %s80 = scalar_lea.vmem %s1, %s79
      %v81 = vld [vmem:[%s80] sm:$0xff]
      %s82 = sld [smem:[#allocation2 + $0xc]]
      %v83 = vstv %s82
      %v84 = vmul.f32 %v81, %v83
      %s85 = sld [smem:[#allocation2 + $0xd]]
      %v86 = vstv %s85
      %v87 = vmul.f32 %v81, %v86
      %s88 = sld [smem:[#allocation2 + $0xe]]
      %v89 = vstv %s88
      %v90 = vmul.f32 %v81, %v89
      %s91 = sld [smem:[#allocation2 + $0xf]]
      %v92 = vstv %s91
      %v93 = vmul.f32 %v81, %v92
      %s94 = sld [smem:[#allocation2 + $0x10]]
      %v95 = vstv %s94
      %v96 = vmul.f32 %v81, %v95
      %s97 = sld [smem:[#allocation2 + $0x11]]
      %v98 = vstv %s97
      %v99 = vmul.f32 %v81, %v98
      %v100 = vadd.f32 %v73, %v84
      %v101 = vadd.f32 %v74, %v87
      %v102 = vadd.f32 %v75, %v90
      %v103 = vadd.f32 %v76, %v93
      %v104 = vadd.f32 %v77, %v96
      %v105 = vadd.f32 %v78, %v99
      %s106 = sadd.s32 %s31, 48
      %s107 = scalar_lea.vmem %s1, %s106
      %v108 = vld [vmem:[%s107] sm:$0xff]
      %s109 = sld [smem:[#allocation2 + $0x12]]
      %v110 = vstv %s109
      %v111 = vmul.f32 %v108, %v110
      %s112 = sld [smem:[#allocation2 + $0x13]]
      %v113 = vstv %s112
      %v114 = vmul.f32 %v108, %v113
      %s115 = sld [smem:[#allocation2 + $0x14]]
      %v116 = vstv %s115
      %v117 = vmul.f32 %v108, %v116
      %s118 = sld [smem:[#allocation2 + $0x15]]
      %v119 = vstv %s118
      %v120 = vmul.f32 %v108, %v119
      %s121 = sld [smem:[#allocation2 + $0x16]]
      %v122 = vstv %s121
      %v123 = vmul.f32 %v108, %v122
      %s124 = sld [smem:[#allocation2 + $0x17]]
      %v125 = vstv %s124
      %v126 = vmul.f32 %v108, %v125
      %v127 = vadd.f32 %v100, %v111
      %v128 = vadd.f32 %v101, %v114
      %v129 = vadd.f32 %v102, %v117
      %v130 = vadd.f32 %v103, %v120
      %v131 = vadd.f32 %v104, %v123
      %v132 = vadd.f32 %v105, %v126
      %s133 = sadd.s32 %s31, 64
      %s134 = scalar_lea.vmem %s1, %s133
      %v135 = vld [vmem:[%s134] sm:$0xff]
      %s136 = sld [smem:[#allocation2 + $0x18]]
      %v137 = vstv %s136
      %v138 = vmul.f32 %v135, %v137
      %s139 = sld [smem:[#allocation2 + $0x19]]
      %v140 = vstv %s139
      %v141 = vmul.f32 %v135, %v140
      %s142 = sld [smem:[#allocation2 + $0x1a]]
      %v143 = vstv %s142
      %v144 = vmul.f32 %v135, %v143
      %s145 = sld [smem:[#allocation2 + $0x1b]]
      %v146 = vstv %s145
      %v147 = vmul.f32 %v135, %v146
      %s148 = sld [smem:[#allocation2 + $0x1c]]
      %v149 = vstv %s148
      %v150 = vmul.f32 %v135, %v149
      %s151 = sld [smem:[#allocation2 + $0x1d]]
      %v152 = vstv %s151
      %v153 = vmul.f32 %v135, %v152
      %v154 = vadd.f32 %v127, %v138
      %v155 = vadd.f32 %v128, %v141
      %v156 = vadd.f32 %v129, %v144
      %v157 = vadd.f32 %v130, %v147
      %v158 = vadd.f32 %v131, %v150
      %v159 = vadd.f32 %v132, %v153
      %s160 = sadd.s32 %s31, 80
      %s161 = scalar_lea.vmem %s1, %s160
      %v162 = vld [vmem:[%s161] sm:$0xff]
      %s163 = sld [smem:[#allocation2 + $0x1e]]
      %v164 = vstv %s163
      %v165 = vmul.f32 %v162, %v164
      %s166 = sld [smem:[#allocation2 + $0x1f]]
      %v167 = vstv %s166
      %v168 = vmul.f32 %v162, %v167
      %s169 = sld [smem:[#allocation2 + $0x20]]
      %v170 = vstv %s169
      %v171 = vmul.f32 %v162, %v170
      %s172 = sld [smem:[#allocation2 + $0x21]]
      %v173 = vstv %s172
      %v174 = vmul.f32 %v162, %v173
      %s175 = sld [smem:[#allocation2 + $0x22]]
      %v176 = vstv %s175
      %v177 = vmul.f32 %v162, %v176
      %s178 = sld [smem:[#allocation2 + $0x23]]
      %v179 = vstv %s178
      %v180 = vmul.f32 %v162, %v179
      %v181 = vadd.f32 %v154, %v165
      %v182 = vadd.f32 %v155, %v168
      %v183 = vadd.f32 %v156, %v171
      %v184 = vadd.f32 %v157, %v174
      %v185 = vadd.f32 %v158, %v177
      %v186 = vadd.f32 %v159, %v180
      %s187 = sadd.s32 %s31, 96
      %s188 = scalar_lea.vmem %s1, %s187
      %v189 = vld [vmem:[%s188] sm:$0xff]
      %s190 = sld [smem:[#allocation2 + $0x24]]
      %v191 = vstv %s190
      %v192 = vmul.f32 %v189, %v191
      %s193 = sld [smem:[#allocation2 + $0x25]]
      %v194 = vstv %s193
      %v195 = vmul.f32 %v189, %v194
      %s196 = sld [smem:[#allocation2 + $0x26]]
      %v197 = vstv %s196
      %v198 = vmul.f32 %v189, %v197
      %s199 = sld [smem:[#allocation2 + $0x27]]
      %v200 = vstv %s199
      %v201 = vmul.f32 %v189, %v200
      %s202 = sld [smem:[#allocation2 + $0x28]]
      %v203 = vstv %s202
      %v204 = vmul.f32 %v189, %v203
      %s205 = sld [smem:[#allocation2 + $0x29]]
      %v206 = vstv %s205
      %v207 = vmul.f32 %v189, %v206
      %v208 = vadd.f32 %v181, %v192
      %v209 = vadd.f32 %v182, %v195
      %v210 = vadd.f32 %v183, %v198
      %v211 = vadd.f32 %v184, %v201
      %v212 = vadd.f32 %v185, %v204
      %v213 = vadd.f32 %v186, %v207
      %s214 = sadd.s32 %s31, 112
      %s215 = scalar_lea.vmem %s1, %s214
      %v216 = vld [vmem:[%s215] sm:$0xff]
      %s217 = sld [smem:[#allocation2 + $0x2a]]
      %v218 = vstv %s217
      %v219 = vmul.f32 %v216, %v218
      %s220 = sld [smem:[#allocation2 + $0x2b]]
      %v221 = vstv %s220
      %v222 = vmul.f32 %v216, %v221
      %s223 = sld [smem:[#allocation2 + $0x2c]]
      %v224 = vstv %s223
      %v225 = vmul.f32 %v216, %v224
      %s226 = sld [smem:[#allocation2 + $0x2d]]
      %v227 = vstv %s226
      %v228 = vmul.f32 %v216, %v227
      %s229 = sld [smem:[#allocation2 + $0x2e]]
      %v230 = vstv %s229
      %v231 = vmul.f32 %v216, %v230
      %s232 = sld [smem:[#allocation2 + $0x2f]]
      %v233 = vstv %s232
      %v234 = vmul.f32 %v216, %v233
      %v235 = vadd.f32 %v208, %v219
      %v236 = vadd.f32 %v209, %v222
      %v237 = vadd.f32 %v210, %v225
      %v238 = vadd.f32 %v211, %v228
      %v239 = vadd.f32 %v212, %v231
      %v240 = vadd.f32 %v213, %v234
      %s241 = sld [smem:[#allocation2 + $0x30]]
      %v242 = vstv %s241
      %v243 = vadd.f32 %v235, %v242
      %v244 = vmul.f32 %v243, 0.5
      %v245 = vtanh.pop %v244
      %v246 = vmul.f32 %v245, 0.5
      %v247 = vadd.f32 %v246, 0.5
      %s248 = sld [smem:[#allocation2 + $0x31]]
      %v249 = vstv %s248
      %v250 = vadd.f32 %v236, %v249
      %v251 = vmul.f32 %v250, 0.5
      %v252 = vtanh.pop %v251
      %v253 = vmul.f32 %v252, 0.5
      %v254 = vadd.f32 %v253, 0.5
      %s255 = sld [smem:[#allocation2 + $0x32]]
      %v256 = vstv %s255
      %v257 = vadd.f32 %v237, %v256
      %v258 = vmul.f32 %v257, 0.5
      %v259 = vtanh.pop %v258
      %v260 = vmul.f32 %v259, 0.5
      %v261 = vadd.f32 %v260, 0.5
      %s262 = sld [smem:[#allocation2 + $0x33]]
      %v263 = vstv %s262
      %v264 = vadd.f32 %v238, %v263
      %v265 = vmul.f32 %v264, 0.5
      %v266 = vtanh.pop %v265
      %v267 = vmul.f32 %v266, 0.5
      %v268 = vadd.f32 %v267, 0.5
      %s269 = sld [smem:[#allocation2 + $0x34]]
      %v270 = vstv %s269
      %v271 = vadd.f32 %v239, %v270
      %v272 = vmul.f32 %v271, 0.5
      %v273 = vtanh.pop %v272
      %v274 = vmul.f32 %v273, 0.5
      %v275 = vadd.f32 %v274, 0.5
      %s276 = sld [smem:[#allocation2 + $0x35]]
      %v277 = vstv %s276
      %v278 = vadd.f32 %v240, %v277
      %v279 = vmul.f32 %v278, 0.5
      %v280 = vtanh.pop %v279
      %v281 = vmul.f32 %v280, 0.5
      %v282 = vadd.f32 %v281, 0.5
      %s283 = sld [smem:[#allocation2 + $0x36]]
      %v284 = vstv %s283
      %v285 = vmul.f32 %v247, %v284
      %s286 = sld [smem:[#allocation2 + $0x37]]
      %v287 = vstv %s286
      %v288 = vmul.f32 %v247, %v287
      %s289 = sld [smem:[#allocation2 + $0x38]]
      %v290 = vstv %s289
      %v291 = vmul.f32 %v247, %v290
      %s292 = sld [smem:[#allocation2 + $0x39]]
      %v293 = vstv %s292
      %v294 = vmul.f32 %v247, %v293
      %s295 = sld [smem:[#allocation2 + $0x3a]]
      %v296 = vstv %s295
      %v297 = vmul.f32 %v254, %v296
      %s298 = sld [smem:[#allocation2 + $0x3b]]
      %v299 = vstv %s298
      %v300 = vmul.f32 %v254, %v299
      %s301 = sld [smem:[#allocation2 + $0x3c]]
      %v302 = vstv %s301
      %v303 = vmul.f32 %v254, %v302
      %s304 = sld [smem:[#allocation2 + $0x3d]]
      %v305 = vstv %s304
      %v306 = vmul.f32 %v254, %v305
      %v307 = vadd.f32 %v285, %v297
      %v308 = vadd.f32 %v288, %v300
      %v309 = vadd.f32 %v291, %v303
      %v310 = vadd.f32 %v294, %v306
      %s311 = sld [smem:[#allocation2 + $0x3e]]
      %v312 = vstv %s311
      %v313 = vmul.f32 %v261, %v312
      %s314 = sld [smem:[#allocation2 + $0x3f]]
      %v315 = vstv %s314
      %v316 = vmul.f32 %v261, %v315
      %s317 = sld [smem:[#allocation2 + $0x40]]
      %v318 = vstv %s317
      %v319 = vmul.f32 %v261, %v318
      %s320 = sld [smem:[#allocation2 + $0x41]]
      %v321 = vstv %s320
      %v322 = vmul.f32 %v261, %v321
      %v323 = vadd.f32 %v307, %v313
      %v324 = vadd.f32 %v308, %v316
      %v325 = vadd.f32 %v309, %v319
      %v326 = vadd.f32 %v310, %v322
      %s327 = sld [smem:[#allocation2 + $0x42]]
      %v328 = vstv %s327
      %v329 = vmul.f32 %v268, %v328
      %s330 = sld [smem:[#allocation2 + $0x43]]
      %v331 = vstv %s330
      %v332 = vmul.f32 %v268, %v331
      %s333 = sld [smem:[#allocation2 + $0x44]]
      %v334 = vstv %s333
      %v335 = vmul.f32 %v268, %v334
      %s336 = sld [smem:[#allocation2 + $0x45]]
      %v337 = vstv %s336
      %v338 = vmul.f32 %v268, %v337
      %v339 = vadd.f32 %v323, %v329
      %v340 = vadd.f32 %v324, %v332
      %v341 = vadd.f32 %v325, %v335
      %v342 = vadd.f32 %v326, %v338
      %s343 = sld [smem:[#allocation2 + $0x46]]
      %v344 = vstv %s343
      %v345 = vmul.f32 %v275, %v344
      %s346 = sld [smem:[#allocation2 + $0x47]]
      %v347 = vstv %s346
      %v348 = vmul.f32 %v275, %v347
      %s349 = sld [smem:[#allocation2 + $0x48]]
      %v350 = vstv %s349
      %v351 = vmul.f32 %v275, %v350
      %s352 = sld [smem:[#allocation2 + $0x49]]
      %v353 = vstv %s352
      %v354 = vmul.f32 %v275, %v353
      %v355 = vadd.f32 %v339, %v345
      %v356 = vadd.f32 %v340, %v348
      %v357 = vadd.f32 %v341, %v351
      %v358 = vadd.f32 %v342, %v354
      %s359 = sld [smem:[#allocation2 + $0x4a]]
      %v360 = vstv %s359
      %v361 = vmul.f32 %v282, %v360
      %s362 = sld [smem:[#allocation2 + $0x4b]]
      %v363 = vstv %s362
      %v364 = vmul.f32 %v282, %v363
      %s365 = sld [smem:[#allocation2 + $0x4c]]
      %v366 = vstv %s365
      %v367 = vmul.f32 %v282, %v366
      %s368 = sld [smem:[#allocation2 + $0x4d]]
      %v369 = vstv %s368
      %v370 = vmul.f32 %v282, %v369
      %v371 = vadd.f32 %v355, %v361
      %v372 = vadd.f32 %v356, %v364
      %v373 = vadd.f32 %v357, %v367
      %v374 = vadd.f32 %v358, %v370
      %s375 = sld [smem:[#allocation2 + $0x4e]]
      %v376 = vstv %s375
      %v377 = vadd.f32 %v371, %v376
      %v378 = vmul.f32 %v377, 0.5
      %v379 = vtanh.pop %v378
      %v380 = vmul.f32 %v379, 0.5
      %v381 = vadd.f32 %v380, 0.5
      %s382 = sld [smem:[#allocation2 + $0x4f]]
      %v383 = vstv %s382
      %v384 = vadd.f32 %v372, %v383
      %v385 = vmul.f32 %v384, 0.5
      %v386 = vtanh.pop %v385
      %v387 = vmul.f32 %v386, 0.5
      %v388 = vadd.f32 %v387, 0.5
      %s389 = sld [smem:[#allocation2 + $0x50]]
      %v390 = vstv %s389
      %v391 = vadd.f32 %v373, %v390
      %v392 = vmul.f32 %v391, 0.5
      %v393 = vtanh.pop %v392
      %v394 = vmul.f32 %v393, 0.5
      %v395 = vadd.f32 %v394, 0.5
      %s396 = sld [smem:[#allocation2 + $0x51]]
      %v397 = vstv %s396
      %v398 = vadd.f32 %v374, %v397
      %v399 = vmul.f32 %v398, 0.5
      %v400 = vtanh.pop %v399
      %v401 = vmul.f32 %v400, 0.5
      %v402 = vadd.f32 %v401, 0.5
      %s403 = sld [smem:[#allocation2 + $0x52]]
      %v404 = vstv %s403
      %v405 = vmul.f32 %v381, %v404
      %s406 = sld [smem:[#allocation2 + $0x53]]
      %v407 = vstv %s406
      %v408 = vmul.f32 %v381, %v407
      %s409 = sld [smem:[#allocation2 + $0x54]]
      %v410 = vstv %s409
      %v411 = vmul.f32 %v388, %v410
      %s412 = sld [smem:[#allocation2 + $0x55]]
      %v413 = vstv %s412
      %v414 = vmul.f32 %v388, %v413
      %v415 = vadd.f32 %v405, %v411
      %v416 = vadd.f32 %v408, %v414
      %s417 = sld [smem:[#allocation2 + $0x56]]
      %v418 = vstv %s417
      %v419 = vmul.f32 %v395, %v418
      %s420 = sld [smem:[#allocation2 + $0x57]]
      %v421 = vstv %s420
      %v422 = vmul.f32 %v395, %v421
      %v423 = vadd.f32 %v415, %v419
      %v424 = vadd.f32 %v416, %v422
      %s425 = sld [smem:[#allocation2 + $0x58]]
      %v426 = vstv %s425
      %v427 = vmul.f32 %v402, %v426
      %s428 = sld [smem:[#allocation2 + $0x59]]
      %v429 = vstv %s428
      %v430 = vmul.f32 %v402, %v429
      %v431 = vadd.f32 %v423, %v427
      %v432 = vadd.f32 %v424, %v430
      %s433 = sld [smem:[#allocation2 + $0x5a]]
      %v434 = vstv %s433
      %v435 = vadd.f32 %v431, %v434
      %v436 = vmul.f32 %v435, 0.5
      %v437 = vtanh.pop %v436
      %v438 = vmul.f32 %v437, 0.5
      %v439 = vadd.f32 %v438, 0.5
      %s440 = sld [smem:[#allocation2 + $0x5b]]
      %v441 = vstv %s440
      %v442 = vadd.f32 %v432, %v441
      %v443 = vmul.f32 %v442, 0.5
      %v444 = vtanh.pop %v443
      %v445 = vmul.f32 %v444, 0.5
      %v446 = vadd.f32 %v445, 0.5
      %s447 = sld [smem:[#allocation2 + $0x5c]]
      %v448 = vstv %s447
      %v449 = vmul.f32 %v439, %v448
      %s450 = sld [smem:[#allocation2 + $0x5d]]
      %v451 = vstv %s450
      %v452 = vmul.f32 %v446, %v451
      %v453 = vadd.f32 %v449, %v452
      %s454 = sld [smem:[#allocation2 + $0x5e]]
      %v455 = vstv %s454
      %v456 = vadd.f32 %v453, %v455
      %v457 = vmul.f32 %v456, 0.5
      %v458 = vtanh.pop %v457
      %v459 = vmul.f32 %v458, 0.5
      %v460 = vadd.f32 %v459, 0.5
      %s461 = scalar_lea.vmem [#allocation5], %s31
      %462 = vst [vmem:[%s461] sm:$0xff] %v460
    $region18: #{mlp_forward.1} parent=1 // loop_footer
      %s30 = sadd.s32 1, %s26
    $region19: #{mlp_forward.1} parent=1 // loop_footer_branch
      %25 = sbr.rel target = $region15
    $region20: #{mlp_forward.1} parent=1 // loop_exit
      _
    // Predicated region
    $region21: #{mlp_forward.1} parent=1 // pred_check
      _
    $region22: #{mlp_forward.1} parent=1 // pred_check_branch
      %464 = sbr.rel (0) target = $region24
    $region23: #{mlp_forward.1} parent=1 // pred_region
      %s466 = ssub.s32 256, 256
      %467 = vsyncadd [#allocation3], %s466
      %s468 = sshll.u32 [#allocation5], 4
      %s469 = int_to_ptr.vmem [resolvable:$true] %s468
      %474 = dma.vmem_to_hbm [thread:$0]  %s469, 256, %s2, [#allocation3], 128, 128, 8
    $region24: #{mlp_forward.1} parent=1 // pred_fallthru
      _
    // Predicated region
    $region25: #{mlp_forward.1} parent=1 // pred_check
      _
    $region26: #{mlp_forward.1} parent=1 // pred_check_branch
      %476 = sbr.rel (0) target = $region28
    $region27: #{mlp_forward.1} parent=1 // pred_region
      %477 = dma.done [#allocation3], 256
    $region28: #{mlp_forward.1} parent=1 // pred_fallthru
      _
    %478 = vsyncpa [#allocation3], 1
    %479 = vsyncpa [#allocation4], 1

</llo_original>
